<compile_context>
chip_gen: v7x
topology: tpu7x:2x2x1
jax: 0.10.0
libtpu: 0.0.40
codegen_flags: <defaults>
</compile_context>

<pallas_src>
import functools

import jax
import jax.numpy as jnp
from jax.experimental import pallas as pl
from jax.experimental.pallas import tpu as pltpu


def _round_up(n, m):
    return ((n + m - 1) // m) * m


# ----------------------------------------------------------------------------
# Pallas kernel: one (batch, time-tile) block.
# Fuses: dilated feat conv + dilated gate conv (single matmul), tanh*sigmoid,
#        1x1 mix conv, residual add.
# ----------------------------------------------------------------------------
def _residual_block_kernel(*refs, C, tile_t, K, dilation, pad):
    # With pad > 0:
    #   halo_ref : (1, 1, C, pad)      the `pad` samples preceding this tile
    # Always:
    #   x_ref    : (1, C, tile_t)      current lane-aligned tile of x (fp32)
    #   w_ref    : (2C, K*C)  bf16     [feat; gate] weights, taps on contraction
    #   b_ref    : (2C, 1)    fp32     [feat; gate] biases
    #   mw_ref   : (C, C)     bf16     1x1 mix weights
    #   mb_ref   : (C, 1)     fp32     mix bias
    if pad > 0:
        halo_ref, x_ref, w_ref, b_ref, mw_ref, mb_ref, skip_ref, res_ref = refs
        halo_bf = halo_ref[0, 0].astype(jnp.bfloat16)            # (C, pad)
    else:
        x_ref, w_ref, b_ref, mw_ref, mb_ref, skip_ref, res_ref = refs

    xc = x_ref[0]                                                # (C, tile_t) fp32
    xc_bf = xc.astype(jnp.bfloat16)

    # Build the K dilated taps.  Tap k sees x shifted right by (pad - k*dil).
    # The last tap (offset == pad) is exactly the aligned tile: use it directly.
    taps = []
    for k in range(K):
        off = k * dilation
        if off >= pad:                                           # k == K-1
            taps.append(xc_bf)
        else:
            n_h = min(pad - off, tile_t)                         # cols from halo
            n_x = tile_t - n_h                                   # cols from xc
            if n_x > 0:
                taps.append(jnp.concatenate(
                    [halo_bf[:, off:off + n_h], xc_bf[:, :n_x]], axis=-1))
            else:                                                # pad >= tile_t
                taps.append(halo_bf[:, off:off + tile_t])

    # Stack taps along the contraction axis -> (K*C, tile_t).
    x_stack = taps[0] if K == 1 else jnp.concatenate(taps, axis=0)

    # One fused MXU matmul for feat+gate, fp32 accumulate, bias added after.
    fg = jnp.dot(w_ref[...], x_stack,
                 preferred_element_type=jnp.float32) + b_ref[...]   # (2C, tile_t)
    feat = fg[:C]
    gate = fg[C:]

    # Gated activation unit (fp32; bf16 EUP would also be valid on v6e/v7x).
    z = jnp.tanh(feat) * jax.nn.sigmoid(gate)                    # (C, tile_t)

    # 1x1 mix conv (bf16 operands, fp32 accumulate) + bias.
    skip = jnp.dot(mw_ref[...], z.astype(jnp.bfloat16),
                   preferred_element_type=jnp.float32) + mb_ref[...]

    skip_ref[0] = skip.astype(skip_ref.dtype)
    # Residual uses the lane-aligned unpadded tile directly.
    res_ref[0] = (skip + xc).astype(res_ref.dtype)


# ----------------------------------------------------------------------------
# Tiling / VMEM planning
# ----------------------------------------------------------------------------
def _vmem_limit_bytes():
    """Half the physical VMEM: 64 MiB on v5e/v6e (128 MiB), 32 MiB on v7x (64 MiB)."""
    try:
        cap = pltpu.get_tpu_info().vmem_capacity_bytes
    except Exception:
        cap = 64 * 1024 * 1024
    return int(min(cap // 2, 64 * 1024 * 1024))


def _plan_time_tiling(T, C, K, pad, vmem_limit_bytes):
    """Pick (tile_t, T_pad).  Budgets pipelined buffers + kernel temps per step."""
    # Per time-column bytes: double-buffered x-in + 2 outputs (24*C) plus
    # bf16/fp32 kernel temps (xc_bf, shifted taps, x_stack, fg, z, skip, ...).
    bytes_per_col = (24 + 10 + 8 * K + 8) * max(C, 1)
    cap_cols = int(0.7 * vmem_limit_bytes) // bytes_per_col
    cap_cols = max(128, (cap_cols // 128) * 128)

    if T <= cap_cols:                         # small signal: one tile, no padding
        return T, T

    # Multi-tile: tile must be a lane multiple and cover the causal halo.
    min_tile = max(128, _round_up(pad, 128))
    hi = min(cap_cols, (T // 128) * 128)

    cand = hi                                 # prefer a tile that divides T exactly
    while cand >= min_tile:
        if T % cand == 0:
            return cand, T
        cand -= 128

    tile = max(min_tile, hi)                  # no divisor: pad T up on the right
    return tile, _round_up(T, tile)


# ----------------------------------------------------------------------------
# Wrapper
# ----------------------------------------------------------------------------
def residual_block_forward(x, params, *, kernel_size, dilation, tile_t=None):
    """x: (B, C, T). Returns (skip, residual), each (B, C, T)."""
    B, C, T = x.shape
    K = kernel_size
    pad = dilation * (K - 1)

    vmem_limit = _vmem_limit_bytes()

    if tile_t is not None and T % tile_t == 0 and (tile_t == T or tile_t >= pad):
        T_pad = T
    else:
        tile_t, T_pad = _plan_time_tiling(T, C, K, pad, vmem_limit)
    num_t = T_pad // tile_t

    # Right-pad T only when no clean tiling exists (causal conv => harmless).
    x_p = x if T_pad == T else jnp.pad(x, ((0, 0), (0, 0), (0, T_pad - T)))

    feat_w, feat_b, gate_w, gate_b, mix_w, mix_b = params

    # Repack weights: single lane-dense (2C, K*C) bf16 matrix.
    # W_comb[o, k*C + i] = feat_w[o, i, k]  (rows 0..C-1)  /  gate_w (rows C..2C-1)
    feat_w_r = jnp.transpose(feat_w, (0, 2, 1)).reshape(C, K * C)
    gate_w_r = jnp.transpose(gate_w, (0, 2, 1)).reshape(C, K * C)
    w_comb = jnp.concatenate([feat_w_r, gate_w_r], axis=0).astype(jnp.bfloat16)
    b_comb = jnp.concatenate([feat_b, gate_b], axis=0).reshape(2 * C, 1)
    b_comb = b_comb.astype(jnp.float32)
    mix_w_bf = mix_w.astype(jnp.bfloat16)
    mix_b2 = mix_b.reshape(C, 1).astype(jnp.float32)

    inputs = []
    in_specs = []
    if pad > 0:
        # Per-tile causal halo: last `pad` columns of the PREVIOUS tile of x
        # (zeros for tile 0).  Built with a free reshape + tiny static slice —
        # no jnp.pad-of-x, no gather.
        if num_t == 1:
            halo = jnp.zeros((B, 1, C, pad), x.dtype)
        else:
            xr = x_p.reshape(B, C, num_t, tile_t)
            tails = xr[:, :, :num_t - 1, tile_t - pad:]          # (B, C, num_t-1, pad)
            halo = jnp.concatenate(
                [jnp.zeros((B, C, 1, pad), x.dtype), tails], axis=2)
            halo = jnp.transpose(halo, (0, 2, 1, 3))             # (B, num_t, C, pad)
        inputs.append(halo)
        in_specs.append(pl.BlockSpec((1, 1, C, pad), lambda b, t: (b, t, 0, 0)))

    inputs += [x_p, w_comb, b_comb, mix_w_bf, mix_b2]
    in_specs += [
        pl.BlockSpec((1, C, tile_t), lambda b, t: (b, 0, t)),    # x tile
        pl.BlockSpec((2 * C, K * C), lambda b, t: (0, 0)),       # W_comb (resident)
        pl.BlockSpec((2 * C, 1), lambda b, t: (0, 0)),           # b_comb
        pl.BlockSpec((C, C), lambda b, t: (0, 0)),               # mix_w
        pl.BlockSpec((C, 1), lambda b, t: (0, 0)),               # mix_b
    ]

    kernel = functools.partial(_residual_block_kernel, C=C, tile_t=tile_t,
                               K=K, dilation=dilation, pad=pad)

    skip, residual = pl.pallas_call(
        kernel,
        out_shape=(jax.ShapeDtypeStruct((B, C, T_pad), x.dtype),
                   jax.ShapeDtypeStruct((B, C, T_pad), x.dtype)),
        grid=(B, num_t),
        in_specs=in_specs,
        out_specs=(
            pl.BlockSpec((1, C, tile_t), lambda b, t: (b, 0, t)),
            pl.BlockSpec((1, C, tile_t), lambda b, t: (b, 0, t)),
        ),
        compiler_params=pltpu.CompilerParams(
            dimension_semantics=("parallel", "parallel"),
            vmem_limit_bytes=vmem_limit),
    )(*inputs)

    if T_pad != T:
        skip = skip[:, :, :T]
        residual = residual[:, :, :T]
    return skip, residual


# ----------------------------------------------------------------------------
# Pure-JAX reference (same math as the PyTorch module).
# `matmul_dtype=bfloat16` mirrors the kernel's bf16-operand / fp32-accumulate
# matmuls for a tight check; float32 is the exact module semantics.
# ----------------------------------------------------------------------------
def _reference_forward(x, params, *, kernel_size, dilation,
                       matmul_dtype=jnp.float32):
    feat_w, feat_b, gate_w, gate_b, mix_w, mix_b = params
    B, C, T = x.shape
    K = kernel_size
    pad = dilation * (K - 1)
    x_pad = jnp.pad(x, ((0, 0), (0, 0), (pad, 0)))

    def cast(a):
        return a.astype(matmul_dtype)

    feat = jnp.zeros((B, C, T), jnp.float32) + feat_b[None, :, None]
    gate = jnp.zeros((B, C, T), jnp.float32) + gate_b[None, :, None]
    for k in range(K):
        xs = x_pad[:, :, k * dilation: k * dilation + T]
        feat = feat + jnp.einsum('oi,bit->bot', cast(feat_w[:, :, k]), cast(xs),
                                 preferred_element_type=jnp.float32)
        gate = gate + jnp.einsum('oi,bit->bot', cast(gate_w[:, :, k]), cast(xs),
                                 preferred_element_type=jnp.float32)
    z = jnp.tanh(feat) * jax.nn.sigmoid(gate)
    skip = jnp.einsum('oi,bit->bot', cast(mix_w), cast(z),
                      preferred_element_type=jnp.float32) + mix_b[None, :, None]
    return skip.astype(x.dtype), (skip + x).astype(x.dtype)


def _make_params(key, C, K, scale=0.5):
    kf, kfb, kg, kgb, km, kmb = jax.random.split(key, 6)
    feat_w = scale * jax.random.normal(kf, (C, C, K), jnp.float32)
    feat_b = scale * jax.random.normal(kfb, (C,), jnp.float32)
    gate_w = scale * jax.random.normal(kg, (C, C, K), jnp.float32)
    gate_b = scale * jax.random.normal(kgb, (C,), jnp.float32)
    mix_w = scale * jax.random.normal(km, (C, C), jnp.float32)
    mix_b = scale * jax.random.normal(kmb, (C,), jnp.float32)
    return (feat_w, feat_b, gate_w, gate_b, mix_w, mix_b)


def _check_case(key, B, C, T, K, dilation, tile_t=None):
    kx, kp = jax.random.split(key)
    x = jax.random.normal(kx, (B, C, T), dtype=jnp.float32)
    params = _make_params(kp, C, K)

    skip, residual = residual_block_forward(
        x, params, kernel_size=K, dilation=dilation, tile_t=tile_t)
    jax.block_until_ready((skip, residual))
    assert skip.shape == (B, C, T) and residual.shape == (B, C, T)

    # Tight check vs. a reference that mirrors the kernel's bf16 matmul inputs.
    skip_m, res_m = _reference_forward(
        x, params, kernel_size=K, dilation=dilation, matmul_dtype=jnp.bfloat16)
    assert jnp.allclose(skip, skip_m, atol=2e-3, rtol=2e-3)
    assert jnp.allclose(residual, res_m, atol=2e-3, rtol=2e-3)

    # Looser check vs. the exact fp32 module semantics (bf16 MXU rounding).
    skip_f, res_f = _reference_forward(
        x, params, kernel_size=K, dilation=dilation, matmul_dtype=jnp.float32)
    assert jnp.allclose(skip, skip_f, atol=1e-1, rtol=1e-1)
    assert jnp.allclose(residual, res_f, atol=1e-1, rtol=1e-1)


if __name__ == "__main__":
    key = jax.random.PRNGKey(0)
    k1, k2 = jax.random.split(key)

    # Small shapes consistent with the module: (batch, channels, signal_length).
    _check_case(k1, B=2, C=4, T=16, K=2, dilation=2)

    # Slightly longer signal with a forced 128-wide time tile to exercise the
    # multi-tile causal-halo path.
    _check_case(k2, B=2, C=8, T=256, K=2, dilation=4, tile_t=128)

    print("KERNEL_OK")
</pallas_src>

<mosaic_0001>
module attributes {stable_mosaic.version = 11 : i64} {
  func.func @_residual_block_kernel(%arg0: i32, %arg1: i32, %arg2: memref<1x1x4x2xf32, #tpu.memory_space<vmem>>, %arg3: memref<1x4x16xf32, #tpu.memory_space<vmem>>, %arg4: memref<8x8xbf16, #tpu.memory_space<vmem>>, %arg5: memref<8x1xf32, #tpu.memory_space<vmem>>, %arg6: memref<4x4xbf16, #tpu.memory_space<vmem>>, %arg7: memref<4x1xf32, #tpu.memory_space<vmem>>, %arg8: memref<1x4x16xf32, #tpu.memory_space<vmem>>, %arg9: memref<1x4x16xf32, #tpu.memory_space<vmem>>) attributes {dimension_semantics = [#tpu.dimension_semantics<parallel>, #tpu.dimension_semantics<parallel>], iteration_bounds = array<i64: 2, 1>, scalar_prefetch = 0 : i64, scratch_operands = 0 : i64, tpu.core_type = #tpu.core_type<tc>, window_params = [{transform_indices = @transform_0, window_bounds = array<i64: 1, 1, 4, 2>}, {transform_indices = @transform_1, window_bounds = array<i64: 1, 4, 16>}, {pipeline_mode = #tpu.pipeline_mode<synchronous>, transform_indices = @transform_2, window_bounds = array<i64: 8, 8>}, {pipeline_mode = #tpu.pipeline_mode<synchronous>, transform_indices = @transform_3, window_bounds = array<i64: 8, 1>}, {pipeline_mode = #tpu.pipeline_mode<synchronous>, transform_indices = @transform_4, window_bounds = array<i64: 4, 4>}, {pipeline_mode = #tpu.pipeline_mode<synchronous>, transform_indices = @transform_5, window_bounds = array<i64: 4, 1>}, {transform_indices = @transform_6, window_bounds = array<i64: 1, 4, 16>}, {transform_indices = @transform_7, window_bounds = array<i64: 1, 4, 16>}]} {
    %c0 = arith.constant 0 : index
    %c0_0 = arith.constant 0 : index
    %c0_1 = arith.constant 0 : index
    %c0_2 = arith.constant 0 : index
    %0 = vector.load %arg2[%c0, %c0_0, %c0_1, %c0_2] : memref<1x1x4x2xf32, #tpu.memory_space<vmem>>, vector<1x1x4x2xf32>
    %1 = vector.shape_cast %0 : vector<1x1x4x2xf32> to vector<4x2xf32>
    %2 = arith.truncf %1 : vector<4x2xf32> to vector<4x2xbf16>
    %c0_3 = arith.constant 0 : index
    %c0_4 = arith.constant 0 : index
    %c0_5 = arith.constant 0 : index
    %3 = vector.load %arg3[%c0_3, %c0_4, %c0_5] : memref<1x4x16xf32, #tpu.memory_space<vmem>>, vector<1x4x16xf32>
    %4 = vector.shape_cast %3 : vector<1x4x16xf32> to vector<4x16xf32>
    %5 = arith.truncf %4 : vector<4x16xf32> to vector<4x16xbf16>
    %6 = vector.extract_strided_slice %5 {offsets = [0, 0], sizes = [4, 14], strides = [1, 1]} : vector<4x16xbf16> to vector<4x14xbf16>
    %7 = tpu.concatenate %2, %6 in 1 : vector<4x2xbf16>, vector<4x14xbf16> -> vector<4x16xbf16>
    %8 = tpu.concatenate %7, %5 in 0 : vector<4x16xbf16>, vector<4x16xbf16> -> vector<8x16xbf16>
    %c0_6 = arith.constant 0 : index
    %c0_7 = arith.constant 0 : index
    %9 = vector.load %arg4[%c0_6, %c0_7] : memref<8x8xbf16, #tpu.memory_space<vmem>>, vector<8x8xbf16>
    %cst = arith.constant dense<0.000000e+00> : vector<8x16xf32>
    %10 = tpu.matmul %9, %8, %cst {dimension_numbers = #tpu.dot_dimension_numbers<[1], [0], [0], [1], [0, 0, 1, 1], [], []>} : vector<8x8xbf16>, vector<8x16xbf16>, vector<8x16xf32> -> vector<8x16xf32>
    %c0_8 = arith.constant 0 : index
    %c0_9 = arith.constant 0 : index
    %11 = vector.load %arg5[%c0_8, %c0_9] : memref<8x1xf32, #tpu.memory_space<vmem>>, vector<8x1xf32>
    %12 = vector.broadcast %11 : vector<8x1xf32> to vector<8x16xf32>
    %13 = arith.addf %10, %12 : vector<8x16xf32>
    %14 = vector.extract_strided_slice %13 {offsets = [0, 0], sizes = [4, 16], strides = [1, 1]} : vector<8x16xf32> to vector<4x16xf32>
    %15 = vector.extract_strided_slice %13 {offsets = [4, 0], sizes = [4, 16], strides = [1, 1]} : vector<8x16xf32> to vector<4x16xf32>
    %16 = math.tanh %14 : vector<4x16xf32>
    %17 = arith.negf %15 : vector<4x16xf32>
    %18 = math.exp %17 : vector<4x16xf32>
    %cst_10 = arith.constant 1.000000e+00 : f32
    %19 = vector.broadcast %cst_10 : f32 to vector<4x16xf32>
    %20 = arith.addf %19, %18 : vector<4x16xf32>
    %21 = arith.divf %19, %20 : vector<4x16xf32>
    %22 = arith.mulf %16, %21 : vector<4x16xf32>
    %c0_11 = arith.constant 0 : index
    %c0_12 = arith.constant 0 : index
    %23 = vector.load %arg6[%c0_11, %c0_12] : memref<4x4xbf16, #tpu.memory_space<vmem>>, vector<4x4xbf16>
    %24 = arith.truncf %22 : vector<4x16xf32> to vector<4x16xbf16>
    %cst_13 = arith.constant dense<0.000000e+00> : vector<4x16xf32>
    %25 = tpu.matmul %23, %24, %cst_13 {dimension_numbers = #tpu.dot_dimension_numbers<[1], [0], [0], [1], [0, 0, 1, 1], [], []>} : vector<4x4xbf16>, vector<4x16xbf16>, vector<4x16xf32> -> vector<4x16xf32>
    %c0_14 = arith.constant 0 : index
    %c0_15 = arith.constant 0 : index
    %26 = vector.load %arg7[%c0_14, %c0_15] : memref<4x1xf32, #tpu.memory_space<vmem>>, vector<4x1xf32>
    %27 = vector.broadcast %26 : vector<4x1xf32> to vector<4x16xf32>
    %28 = arith.addf %25, %27 : vector<4x16xf32>
    %c0_16 = arith.constant 0 : index
    %c0_17 = arith.constant 0 : index
    %c0_18 = arith.constant 0 : index
    %29 = vector.load %arg8[%c0_16, %c0_17, %c0_18] : memref<1x4x16xf32, #tpu.memory_space<vmem>>, vector<1x4x16xf32>
    %30 = vector.shape_cast %29 : vector<1x4x16xf32> to vector<4x16xf32>
    %31 = vector.shape_cast %28 : vector<4x16xf32> to vector<1x4x16xf32>
    tpu.vector_store %arg8[%c0_16, %c0_17, %c0_18], %31 {strides = array<i32>} : memref<1x4x16xf32, #tpu.memory_space<vmem>>, vector<1x4x16xf32>,
    %32 = arith.addf %28, %4 : vector<4x16xf32>
    %c0_19 = arith.constant 0 : index
    %c0_20 = arith.constant 0 : index
    %c0_21 = arith.constant 0 : index
    %33 = vector.load %arg9[%c0_19, %c0_20, %c0_21] : memref<1x4x16xf32, #tpu.memory_space<vmem>>, vector<1x4x16xf32>
    %34 = vector.shape_cast %33 : vector<1x4x16xf32> to vector<4x16xf32>
    %35 = vector.shape_cast %32 : vector<4x16xf32> to vector<1x4x16xf32>
    tpu.vector_store %arg9[%c0_19, %c0_20, %c0_21], %35 {strides = array<i32>} : memref<1x4x16xf32, #tpu.memory_space<vmem>>, vector<1x4x16xf32>,
    return
  }
  func.func @transform_0(%arg0: i32, %arg1: i32) -> (i32, i32, i32, i32) {
    %c0_i32 = arith.constant 0 : i32
    %c0_i32_0 = arith.constant 0 : i32
    %c0_i32_1 = arith.constant 0 : i32
    return %arg0, %arg1, %c0_i32, %c0_i32_0 : i32, i32, i32, i32
  }
  func.func @transform_1(%arg0: i32, %arg1: i32) -> (i32, i32, i32) {
    %c0_i32 = arith.constant 0 : i32
    %c0_i32_0 = arith.constant 0 : i32
    return %arg0, %c0_i32, %arg1 : i32, i32, i32
  }
  func.func @transform_2(%arg0: i32, %arg1: i32) -> (i32, i32) {
    %c0_i32 = arith.constant 0 : i32
    %c0_i32_0 = arith.constant 0 : i32
    %c0_i32_1 = arith.constant 0 : i32
    return %c0_i32, %c0_i32_0 : i32, i32
  }
  func.func @transform_3(%arg0: i32, %arg1: i32) -> (i32, i32) {
    %c0_i32 = arith.constant 0 : i32
    %c0_i32_0 = arith.constant 0 : i32
    %c0_i32_1 = arith.constant 0 : i32
    return %c0_i32, %c0_i32_0 : i32, i32
  }
  func.func @transform_4(%arg0: i32, %arg1: i32) -> (i32, i32) {
    %c0_i32 = arith.constant 0 : i32
    %c0_i32_0 = arith.constant 0 : i32
    %c0_i32_1 = arith.constant 0 : i32
    return %c0_i32, %c0_i32_0 : i32, i32
  }
  func.func @transform_5(%arg0: i32, %arg1: i32) -> (i32, i32) {
    %c0_i32 = arith.constant 0 : i32
    %c0_i32_0 = arith.constant 0 : i32
    %c0_i32_1 = arith.constant 0 : i32
    return %c0_i32, %c0_i32_0 : i32, i32
  }
  func.func @transform_6(%arg0: i32, %arg1: i32) -> (i32, i32, i32) {
    %c0_i32 = arith.constant 0 : i32
    %c0_i32_0 = arith.constant 0 : i32
    return %arg0, %c0_i32, %arg1 : i32, i32, i32
  }
  func.func @transform_7(%arg0: i32, %arg1: i32) -> (i32, i32, i32) {
    %c0_i32 = arith.constant 0 : i32
    %c0_i32_0 = arith.constant 0 : i32
    return %arg0, %c0_i32, %arg1 : i32, i32, i32
  }
}

</mosaic_0001>

<llo_original>
// kernel: tpu_custom_call.1
$region0: #{tpu_custom_call.1}
  #allocation0 [shape = 'u32[]', space=smem, size = 0x4, offset = 0x4, fixed_abs, tag = 'smem constant byte address 0x4 - core index']
  #allocation1 [shape = 'u32[144,128]{1,0:T(1,128)}', space=vmem, size = 0x12000, scoped, tag = 'internal scratch']
  %s0 = inlined_call_operand.vmem [shape: f32[2,1,4,2], index: 0, kind: input, shape index: {}]
  %s1 = inlined_call_operand.vmem [shape: f32[2,4,16], index: 1, kind: input, shape index: {}]
  %s2 = inlined_call_operand.vmem [shape: bf16[8,8], index: 2, kind: input, shape index: {}]
  %s3 = inlined_call_operand.vmem [shape: f32[8,1], index: 3, kind: input, shape index: {}]
  %s4 = inlined_call_operand.vmem [shape: bf16[4,4], index: 4, kind: input, shape index: {}]
  %s5 = inlined_call_operand.vmem [shape: f32[4,1], index: 5, kind: input, shape index: {}]
  %s6 = inlined_call_operand.hbm [shape: f32[2,4,16], index: 6, kind: output, shape index: {0}]
  %s7 = inlined_call_operand.hbm [shape: f32[2,4,16], index: 7, kind: output, shape index: {1}]
  %8 = xla_tuple %s6, %s7
  %s9 = sld [smem:[#allocation0]]
  $region65: #{tpu_custom_call.1} parent=0
    _
  %s11 = ssub.s32 1, %s9
  %s12 = scalar_select 0, %s11, %s9
  $region1: #{tpu_custom_call.1} parent=0
    #allocation2 [shape = 'u8[4096]{0}', space=vmem, size = 0x1000, scoped, tag = 'output window, operand 0']
    #allocation3 [shape = 's32[2]{0}', space=sflag, size = 0x8, scoped, tag = 'scoped memory for tpu_custom_call.1']
    #allocation4 [shape = 'u8[4096]{0}', space=vmem, size = 0x1000, scoped, tag = 'output window, operand 1']
    #allocation5 [shape = 's32[2]{0}', space=sflag, size = 0x8, scoped, tag = 'scoped memory for tpu_custom_call.1']
    %13 = vsyncpa [#allocation3], 0
    %s14 = scalar_lea.sflag [#allocation3], 1
    %15 = vsyncpa %s14, 0
    %16 = vsyncpa [#allocation5], 0
    %s17 = scalar_lea.sflag [#allocation5], 1
    %18 = vsyncpa %s17, 0
    loop: start=0, step=1, limit=4
    $region2: #{tpu_custom_call.1} parent=1 // loop_pre_header
      _
    $region3: #{tpu_custom_call.1} parent=1 // loop_header
      %s20 = sphi 0, %s24
      %p21 = scmp.ge.s32.totalorder %s20, 4
      %s27 = sphi 0, %s39
      %s28 = sphi 0, %s35
      %s29 = sphi 0, %s27
      %s30 = sphi 0, %s28
      %s31 = sphi 0, %s29
      %s32 = sphi 0, %s30
      %s44 = sphi 0, %s46
      %s47 = sphi 0, %s44
      %s48 = sphi 0, %s47
      %s64 = sphi 0, %s48
      %s72 = sphi 0, %s74
      %s75 = sphi 0, %s72
      %s76 = sphi 0, %s75
      %s92 = sphi 0, %s76
      %s96 = sphi 0, %s96
      %s98 = sphi 0, %s96
      %s99 = sphi 0, %s98
      %s113 = sphi 0, %s99
      %s117 = sphi 0, %s117
      %s119 = sphi 0, %s117
      %s120 = sphi 0, %s119
      %s134 = sphi 0, %s120
      %s138 = sphi 0, %s138
      %s140 = sphi 0, %s138
      %s141 = sphi 0, %s140
      %s155 = sphi 0, %s141
      %s159 = sphi 0, %s159
      %s161 = sphi 0, %s159
      %s162 = sphi 0, %s161
      %s176 = sphi 0, %s162
      %s184 = sphi 0, %s186
      %s187 = sphi 0, %s184
      %s188 = sphi 0, %s187
      %s204 = sphi 0, %s188
      %s212 = sphi 0, %s214
      %s215 = sphi 0, %s212
      %s216 = sphi 0, %s215
      %s232 = sphi 0, %s216
    $region4: #{tpu_custom_call.1} parent=1 // loop_header_branch
      %23 = sbr.rel (%p21) target = $region8
    $region5: #{tpu_custom_call.1} parent=1 // loop_body
      %s25 = ssub.s32 %s20, 1
      %s26 = ssub.s32 %s20, 2
      %s33 = sadd.s32 1, %s28
      %p34 = scmp.ge.s32.totalorder %s33, 1
      %s35 = scalar_select %p34, 0, %s33
      %s36 = sadd.s32 1, %s27
      %s37 = scalar_select %p34, %s36, %s27
      %p38 = scmp.ge.s32.totalorder %s37, 2
      %s39 = scalar_select %p38, 0, %s37
      %s40 = ssub.s32 %s27, %s39
      %s41 = ssub.s32 %s28, %s35
      %s42 = sor.u32 %s40, %s41
      %p43 = scmp.eq.s32.totalorder %s42, 0
      %s45 = sadd.s32 %s44, 1
      %s46 = scalar_select %p43, %s44, %s45
      %p49 = pneg %p43
      %p50 = scmp.eq.s32.totalorder %s20, 1
      %p51 = por %p49, %p50
      %p52 = scmp.ne.s32.totalorder %s44, %s47
      %p53 = scmp.eq.s32.totalorder %s20, 0
      %p54 = por %p52, %p53
      %p55 = scmp.ne.s32.totalorder %s44, %s47
      %p56 = scmp.eq.s32.totalorder %s25, 1
      %p57 = por %p55, %p56
      %p58 = scmp.ne.s32.totalorder %s47, %s48
      %p59 = scmp.eq.s32.totalorder %s25, 0
      %p60 = por %p58, %p59
      %p61 = scmp.ne.s32.totalorder %s47, %s48
      %p62 = scmp.eq.s32.totalorder %s26, 1
      %p63 = por %p61, %p62
      %p65 = scmp.ne.s32.totalorder %s48, %s64
      %p66 = scmp.eq.s32.totalorder %s26, 0
      %p67 = por %p65, %p66
      %s68 = ssub.s32 %s27, %s39
      %s69 = ssub.s32 %s28, %s35
      %s70 = sor.u32 %s68, %s69
      %p71 = scmp.eq.s32.totalorder %s70, 0
      %s73 = sadd.s32 %s72, 1
      %s74 = scalar_select %p71, %s72, %s73
      %p77 = pneg %p71
      %p78 = scmp.eq.s32.totalorder %s20, 1
      %p79 = por %p77, %p78
      %p80 = scmp.ne.s32.totalorder %s72, %s75
      %p81 = scmp.eq.s32.totalorder %s20, 0
      %p82 = por %p80, %p81
      %p83 = scmp.ne.s32.totalorder %s72, %s75
      %p84 = scmp.eq.s32.totalorder %s25, 1
      %p85 = por %p83, %p84
      %p86 = scmp.ne.s32.totalorder %s75, %s76
      %p87 = scmp.eq.s32.totalorder %s25, 0
      %p88 = por %p86, %p87
      %p89 = scmp.ne.s32.totalorder %s75, %s76
      %p90 = scmp.eq.s32.totalorder %s26, 1
      %p91 = por %p89, %p90
      %p93 = scmp.ne.s32.totalorder %s76, %s92
      %p94 = scmp.eq.s32.totalorder %s26, 0
      %p95 = por %p93, %p94
      %s97 = sadd.s32 %s96, 1
      %p100 = scmp.eq.s32.totalorder %s20, 1
      %p101 = scmp.ne.s32.totalorder %s96, %s98
      %p102 = scmp.eq.s32.totalorder %s20, 0
      %p103 = por %p101, %p102
      %p104 = scmp.ne.s32.totalorder %s96, %s98
      %p105 = scmp.eq.s32.totalorder %s25, 1
      %p106 = por %p104, %p105
      %p107 = scmp.ne.s32.totalorder %s98, %s99
      %p108 = scmp.eq.s32.totalorder %s25, 0
      %p109 = por %p107, %p108
      %p110 = scmp.ne.s32.totalorder %s98, %s99
      %p111 = scmp.eq.s32.totalorder %s26, 1
      %p112 = por %p110, %p111
      %p114 = scmp.ne.s32.totalorder %s99, %s113
      %p115 = scmp.eq.s32.totalorder %s26, 0
      %p116 = por %p114, %p115
      %s118 = sadd.s32 %s117, 1
      %p121 = scmp.eq.s32.totalorder %s20, 1
      %p122 = scmp.ne.s32.totalorder %s117, %s119
      %p123 = scmp.eq.s32.totalorder %s20, 0
      %p124 = por %p122, %p123
      %p125 = scmp.ne.s32.totalorder %s117, %s119
      %p126 = scmp.eq.s32.totalorder %s25, 1
      %p127 = por %p125, %p126
      %p128 = scmp.ne.s32.totalorder %s119, %s120
      %p129 = scmp.eq.s32.totalorder %s25, 0
      %p130 = por %p128, %p129
      %p131 = scmp.ne.s32.totalorder %s119, %s120
      %p132 = scmp.eq.s32.totalorder %s26, 1
      %p133 = por %p131, %p132
      %p135 = scmp.ne.s32.totalorder %s120, %s134
      %p136 = scmp.eq.s32.totalorder %s26, 0
      %p137 = por %p135, %p136
      %s139 = sadd.s32 %s138, 1
      %p142 = scmp.eq.s32.totalorder %s20, 1
      %p143 = scmp.ne.s32.totalorder %s138, %s140
      %p144 = scmp.eq.s32.totalorder %s20, 0
      %p145 = por %p143, %p144
      %p146 = scmp.ne.s32.totalorder %s138, %s140
      %p147 = scmp.eq.s32.totalorder %s25, 1
      %p148 = por %p146, %p147
      %p149 = scmp.ne.s32.totalorder %s140, %s141
      %p150 = scmp.eq.s32.totalorder %s25, 0
      %p151 = por %p149, %p150
      %p152 = scmp.ne.s32.totalorder %s140, %s141
      %p153 = scmp.eq.s32.totalorder %s26, 1
      %p154 = por %p152, %p153
      %p156 = scmp.ne.s32.totalorder %s141, %s155
      %p157 = scmp.eq.s32.totalorder %s26, 0
      %p158 = por %p156, %p157
      %s160 = sadd.s32 %s159, 1
      %p163 = scmp.eq.s32.totalorder %s20, 1
      %p164 = scmp.ne.s32.totalorder %s159, %s161
      %p165 = scmp.eq.s32.totalorder %s20, 0
      %p166 = por %p164, %p165
      %p167 = scmp.ne.s32.totalorder %s159, %s161
      %p168 = scmp.eq.s32.totalorder %s25, 1
      %p169 = por %p167, %p168
      %p170 = scmp.ne.s32.totalorder %s161, %s162
      %p171 = scmp.eq.s32.totalorder %s25, 0
      %p172 = por %p170, %p171
      %p173 = scmp.ne.s32.totalorder %s161, %s162
      %p174 = scmp.eq.s32.totalorder %s26, 1
      %p175 = por %p173, %p174
      %p177 = scmp.ne.s32.totalorder %s162, %s176
      %p178 = scmp.eq.s32.totalorder %s26, 0
      %p179 = por %p177, %p178
      %s180 = ssub.s32 %s27, %s39
      %s181 = ssub.s32 %s28, %s35
      %s182 = sor.u32 %s180, %s181
      %p183 = scmp.eq.s32.totalorder %s182, 0
      %s185 = sadd.s32 %s184, 1
      %s186 = scalar_select %p183, %s184, %s185
      %p189 = pneg %p183
      %p190 = scmp.eq.s32.totalorder %s20, 1
      %p191 = por %p189, %p190
      %p192 = scmp.ne.s32.totalorder %s184, %s187
      %p193 = scmp.eq.s32.totalorder %s20, 0
      %p194 = por %p192, %p193
      %p195 = scmp.ne.s32.totalorder %s184, %s187
      %p196 = scmp.eq.s32.totalorder %s25, 1
      %p197 = por %p195, %p196
      %p198 = scmp.ne.s32.totalorder %s187, %s188
      %p199 = scmp.eq.s32.totalorder %s25, 0
      %p200 = por %p198, %p199
      %p201 = scmp.ne.s32.totalorder %s187, %s188
      %p202 = scmp.eq.s32.totalorder %s26, 1
      %p203 = por %p201, %p202
      %p205 = scmp.ne.s32.totalorder %s188, %s204
      %p206 = scmp.eq.s32.totalorder %s26, 0
      %p207 = por %p205, %p206
      %s208 = ssub.s32 %s27, %s39
      %s209 = ssub.s32 %s28, %s35
      %s210 = sor.u32 %s208, %s209
      %p211 = scmp.eq.s32.totalorder %s210, 0
      %s213 = sadd.s32 %s212, 1
      %s214 = scalar_select %p211, %s212, %s213
      %p217 = pneg %p211
      %p218 = scmp.eq.s32.totalorder %s20, 1
      %p219 = por %p217, %p218
      %p220 = scmp.ne.s32.totalorder %s212, %s215
      %p221 = scmp.eq.s32.totalorder %s20, 0
      %p222 = por %p220, %p221
      %p223 = scmp.ne.s32.totalorder %s212, %s215
      %p224 = scmp.eq.s32.totalorder %s25, 1
      %p225 = por %p223, %p224
      %p226 = scmp.ne.s32.totalorder %s215, %s216
      %p227 = scmp.eq.s32.totalorder %s25, 0
      %p228 = por %p226, %p227
      %p229 = scmp.ne.s32.totalorder %s215, %s216
      %p230 = scmp.eq.s32.totalorder %s26, 1
      %p231 = por %p229, %p230
      %p233 = scmp.ne.s32.totalorder %s216, %s232
      %p234 = scmp.eq.s32.totalorder %s26, 0
      %p235 = por %p233, %p234
      %p236 = scmp.le.s32.totalorder 1, %s20
      %p237 = scmp.lt.s32.totalorder %s20, 3
      %p238 = pnand %p236, %p237
      %p239 = pneg %p238
      // Predicated region
      $region9: #{tpu_custom_call.1} parent=5 // pred_check
        _
      $region10: #{tpu_custom_call.1} parent=5 // pred_check_branch
        %241 = sbr.rel (%p238) target = $region12
      $region11: #{tpu_custom_call.1} parent=5 // pred_region
        %s242 = ssub.s32 %s20, 1
        // Predicated region
        $region13: #{tpu_custom_call.1} parent=11 // pred_check
          %p243 = pneg %p109
        $region14: #{tpu_custom_call.1} parent=11 // pred_check_branch
          %245 = sbr.rel (%p243) target = $region16
        $region15: #{tpu_custom_call.1} parent=11 // pred_region
          _
        $region16: #{tpu_custom_call.1} parent=11 // pred_fallthru
          _
        // Predicated region
        $region17: #{tpu_custom_call.1} parent=11 // pred_check
          %p246 = pneg %p130
        $region18: #{tpu_custom_call.1} parent=11 // pred_check_branch
          %248 = sbr.rel (%p246) target = $region20
        $region19: #{tpu_custom_call.1} parent=11 // pred_region
          _
        $region20: #{tpu_custom_call.1} parent=11 // pred_fallthru
          _
        // Predicated region
        $region21: #{tpu_custom_call.1} parent=11 // pred_check
          %p249 = pneg %p151
        $region22: #{tpu_custom_call.1} parent=11 // pred_check_branch
          %251 = sbr.rel (%p249) target = $region24
        $region23: #{tpu_custom_call.1} parent=11 // pred_region
          _
        $region24: #{tpu_custom_call.1} parent=11 // pred_fallthru
          _
        // Predicated region
        $region25: #{tpu_custom_call.1} parent=11 // pred_check
          %p252 = pneg %p172
        $region26: #{tpu_custom_call.1} parent=11 // pred_check_branch
          %254 = sbr.rel (%p252) target = $region28
        $region27: #{tpu_custom_call.1} parent=11 // pred_region
          _
        $region28: #{tpu_custom_call.1} parent=11 // pred_fallthru
          _
      $region12: #{tpu_custom_call.1} parent=5 // pred_fallthru
        _
      %p255 = scmp.lt.s32.totalorder %s20, 2
      // Predicated region
      $region29: #{tpu_custom_call.1} parent=5 // pred_check
        %p256 = pneg %p255
      $region30: #{tpu_custom_call.1} parent=5 // pred_check_branch
        %258 = sbr.rel (%p256) target = $region32
      $region31: #{tpu_custom_call.1} parent=5 // pred_region
        // Predicated region
        $region33: #{tpu_custom_call.1} parent=31 // pred_check
          %p259 = pneg %p54
        $region34: #{tpu_custom_call.1} parent=31 // pred_check_branch
          %261 = sbr.rel (%p259) target = $region36
        $region35: #{tpu_custom_call.1} parent=31 // pred_region
          %p262 = scmp.lt.s32.totalorder %s27, 1
          %s263 = scalar_select %p262, %s27, 1
          %p264 = scmp.lt.s32.totalorder %s28, 0
          %s265 = scalar_select %p264, %s28, 0
          %s266 = sadd.s32 %s265, %s263
          %s267 = smul.addr %s266, 4
          %s268 = scalar_lea.vmem %s0, %s267
        $region36: #{tpu_custom_call.1} parent=31 // pred_fallthru
          _
        // Predicated region
        $region37: #{tpu_custom_call.1} parent=31 // pred_check
          %p269 = pneg %p82
        $region38: #{tpu_custom_call.1} parent=31 // pred_check_branch
          %271 = sbr.rel (%p269) target = $region40
        $region39: #{tpu_custom_call.1} parent=31 // pred_region
          %p272 = scmp.lt.s32.totalorder %s27, 1
          %s273 = scalar_select %p272, %s27, 1
          %p274 = scmp.lt.s32.totalorder %s28, 0
          %s275 = scalar_select %p274, %s28, 0
          %s276 = sadd.s32 %s275, %s273
          %s277 = smul.addr %s276, 4
          %s278 = scalar_lea.vmem %s1, %s277
        $region40: #{tpu_custom_call.1} parent=31 // pred_fallthru
          _
      $region32: #{tpu_custom_call.1} parent=5 // pred_fallthru
        _
      %p279 = scmp.le.s32.totalorder 1, %s20
      %p280 = scmp.lt.s32.totalorder %s20, 3
      %p281 = pnand %p279, %p280
      %p282 = pneg %p281
      // Predicated region
      $region41: #{tpu_custom_call.1} parent=5 // pred_check
        _
      $region42: #{tpu_custom_call.1} parent=5 // pred_check_branch
        %284 = sbr.rel (%p281) target = $region44
      $region43: #{tpu_custom_call.1} parent=5 // pred_region
        %s285 = ssub.s32 %s20, 1
        %p286 = scmp.lt.s32.totalorder %s29, 1
        %s287 = scalar_select %p286, %s29, 1
        %p288 = scmp.lt.s32.totalorder %s30, 0
        %s289 = scalar_select %p288, %s30, 0
        %s290 = sadd.s32 %s289, %s287
        %s291 = smul.addr %s290, 4
        %s292 = scalar_lea.vmem %s0, %s291
        %p293 = pneg %p60
        %p294 = pneg %p57
        %p295 = scmp.lt.s32.totalorder %s29, 1
        %s296 = scalar_select %p295, %s29, 1
        %p297 = scmp.lt.s32.totalorder %s30, 0
        %s298 = scalar_select %p297, %s30, 0
        %s299 = sadd.s32 %s298, %s296
        %s300 = smul.addr %s299, 4
        %s301 = scalar_lea.vmem %s1, %s300
        %p302 = pneg %p88
        %p303 = pneg %p85
        %p304 = pneg %p109
        %p305 = pneg %p106
        %p306 = pneg %p130
        %p307 = pneg %p127
        %p308 = pneg %p151
        %p309 = pneg %p148
        %p310 = pneg %p172
        %p311 = pneg %p169
        %p312 = pneg %p200
        %p313 = pneg %p197
        %s314 = sand.u32 %s187, 1
        %s315 = scalar_lea.sflag [#allocation3], %s314
        %s316 = sand.u32 %s187, 1
        %s317 = smul.addr %s316, 4
        %s318 = scalar_lea.vmem [#allocation2], %s317
        %p319 = pneg %p228
        %p320 = pneg %p225
        %s321 = sand.u32 %s215, 1
        %s322 = scalar_lea.sflag [#allocation5], %s321
        %s323 = sand.u32 %s215, 1
        %s324 = smul.addr %s323, 4
        %s325 = scalar_lea.vmem [#allocation4], %s324
        %p326 = scmp.lt.s32.totalorder %s29, 1
        %s327 = scalar_select %p326, %s29, 1
        %p328 = scmp.lt.s32.totalorder %s30, 0
        %s329 = scalar_select %p328, %s30, 0
        %s330 = sadd.s32 %s329, %s327
        %s331 = smul.addr %s330, 4
        %s332 = scalar_lea.vmem %s0, %s331
        %p333 = scmp.lt.s32.totalorder %s29, 1
        %s334 = scalar_select %p333, %s29, 1
        %p335 = scmp.lt.s32.totalorder %s30, 0
        %s336 = scalar_select %p335, %s30, 0
        %s337 = sadd.s32 %s336, %s334
        %s338 = smul.addr %s337, 4
        %s339 = scalar_lea.vmem %s1, %s338
        %v341 = vld [vmem:[%s332] sm:$0xf]
        %v342 = vpack.c.bf16 %v341, %v341
        %v343 = vld [vmem:[%s339] sm:$0xf]
        %v344 = vpack.c.bf16 %v343, %v343
        %346 = vrot.lane.b32.xlu0 %v344, 2
        %v347 = vpop.permute.xlu0 %346
        %vm348 = vcmask 15360
        %v351 = vsel %vm348, %v342, %v347
        %v352 = vrot.slane %v344, 6
        %vm353 = vcmask 1041408
        %v355 = vsel %vm353, %v351, %v352
        %v356 = vld [vmem:[%s2] sm:$0xf]
        %v357 = vld [vmem:[%s3] sm:$0xff]
        %359 = vset.pattern.permute.xlu0 0
        %360 = vperm.xlu0 %359, %v357
        %v361 = vpop.permute.xlu0 %360
        %vm363 = vcmask 64512
        %v365 = vsel %vm363, %v356, 0
        %vm367 = vcmask 1043456
        %v368 = vsel %vm367, %v355, 0
        %370 = vmatprep.subr.bf16.mxu0 0
        %371 = vmatpush1.bf16.msra.mxu0 %v368
        %372 = vmatprep.subr.bf16.mxu0 0
        %373 = vmatpush1.bf16.msra.mxu0 0
        %374 = vmatprep.subr.bf16.mxu0 0
        %375 = vmatpush1.bf16.msra.mxu0 0
        %376 = vmatprep.subr.bf16.mxu0 0
        %377 = vmatpush1.bf16.msra.mxu0 0
        %378 = vmatprep.subr.bf16.mxu0 0
        %379 = vmatpush1.bf16.msra.mxu0 0
        %380 = vmatprep.subr.bf16.mxu0 0
        %381 = vmatpush1.bf16.msra.mxu0 0
        %382 = vmatprep.subr.bf16.mxu0 0
        %383 = vmatpush1.bf16.msra.mxu0 0
        %384 = vmatprep.subr.bf16.mxu0 0
        %385 = vmatpush1.bf16.msra.mxu0 0
        %386 = vmatprep.subr.bf16.mxu0 0
        %387 = vmatpush1.bf16.msra.mxu0 0
        %388 = vmatprep.subr.bf16.mxu0 0
        %389 = vmatpush1.bf16.msra.mxu0 0
        %390 = vmatprep.subr.bf16.mxu0 0
        %391 = vmatpush1.bf16.msra.mxu0 0
        %392 = vmatprep.subr.bf16.mxu0 0
        %393 = vmatpush1.bf16.msra.mxu0 0
        %394 = vmatprep.subr.bf16.mxu0 0
        %395 = vmatpush1.bf16.msra.mxu0 0
        %396 = vmatprep.subr.bf16.mxu0 0
        %397 = vmatpush1.bf16.msra.mxu0 0
        %398 = vmatprep.subr.bf16.mxu0 0
        %399 = vmatpush1.bf16.msra.mxu0 0
        %400 = vmatprep.subr.bf16.mxu0 0
        %401 = vmatpush1.bf16.msra.mxu0 0
        %402 = vmatprep.mubr.bf16.mxu0 0
        %403 = vmatmul.mubr.bf16.gmra.mrb[0].mxu0 %v365
        %v404 = vpop.f32.mrb[0].mxu0
        %v405 = vadd.f32 %v361, %v404
        %v406 = vpop.f32.mrb[0].mxu0
        %v407 = vpop.f32.mrb[0].mxu0
        %v408 = vpop.f32.mrb[0].mxu0
        %409 = vdwg.mxu0
        %v410 = vtanh.pop %v405
        %v411 = vxor.u32 %v405, 2147483648
        %v412 = vmul.f32 %v411, 1.442695
        %v413 = vpow.pop %v412
        %v414 = vadd.f32 %v413, 1.0
        %v415 = vrcp.pop %v414
        %v416 = vmul.f32 1.0, %v415
        %v418 = vrot.slane %v416, 4
        %v420 = vmul.f32 %v410, %v418
        %v421 = vld [vmem:[%s4] sm:$0x3]
        %v422 = vpack.c.bf16 %v420, %v420
        %v423 = vld [vmem:[%s5] sm:$0xf]
        %425 = vset.pattern.permute.xlu0 0
        %426 = vperm.xlu0 %425, %v423
        %v427 = vpop.permute.xlu0 %426
        %vm429 = vcmask 31744
        %v431 = vsel %vm429, %v421, 0
        %v434 = vsel %vm353, %v422, 0
        %436 = vmatprep.subr.bf16.mxu0 0
        %437 = vmatpush1.bf16.msra.mxu0 %v434
        %438 = vmatprep.subr.bf16.mxu0 0
        %439 = vmatpush1.bf16.msra.mxu0 0
        %440 = vmatprep.subr.bf16.mxu0 0
        %441 = vmatpush1.bf16.msra.mxu0 0
        %442 = vmatprep.subr.bf16.mxu0 0
        %443 = vmatpush1.bf16.msra.mxu0 0
        %444 = vmatprep.subr.bf16.mxu0 0
        %445 = vmatpush1.bf16.msra.mxu0 0
        %446 = vmatprep.subr.bf16.mxu0 0
        %447 = vmatpush1.bf16.msra.mxu0 0
        %448 = vmatprep.subr.bf16.mxu0 0
        %449 = vmatpush1.bf16.msra.mxu0 0
        %450 = vmatprep.subr.bf16.mxu0 0
        %451 = vmatpush1.bf16.msra.mxu0 0
        %452 = vmatprep.subr.bf16.mxu0 0
        %453 = vmatpush1.bf16.msra.mxu0 0
        %454 = vmatprep.subr.bf16.mxu0 0
        %455 = vmatpush1.bf16.msra.mxu0 0
        %456 = vmatprep.subr.bf16.mxu0 0
        %457 = vmatpush1.bf16.msra.mxu0 0
        %458 = vmatprep.subr.bf16.mxu0 0
        %459 = vmatpush1.bf16.msra.mxu0 0
        %460 = vmatprep.subr.bf16.mxu0 0
        %461 = vmatpush1.bf16.msra.mxu0 0
        %462 = vmatprep.subr.bf16.mxu0 0
        %463 = vmatpush1.bf16.msra.mxu0 0
        %464 = vmatprep.subr.bf16.mxu0 0
        %465 = vmatpush1.bf16.msra.mxu0 0
        %466 = vmatprep.subr.bf16.mxu0 0
        %467 = vmatpush1.bf16.msra.mxu0 0
        %468 = vmatprep.mubr.bf16.mxu0 0
        %469 = vmatmul.mubr.bf16.gmra.mrb[0].mxu0 %v431
        %v470 = vpop.f32.mrb[0].mxu0
        %v471 = vadd.f32 %v427, %v470
        %v472 = vpop.f32.mrb[0].mxu0
        %v473 = vpop.f32.mrb[0].mxu0
        %v474 = vpop.f32.mrb[0].mxu0
        %475 = vdwg.mxu0
        %vm476 = vcmask 125952
        %477 = vst.msk [vmem:[%s318] sm:$0xf] %vm476, %v471
        %v478 = vadd.f32 %v471, %v343
        %479 = vst.msk [vmem:[%s325] sm:$0xf] %vm476, %v478
        %s480 = sand.u32 %s187, 1
        %s481 = scalar_lea.sflag [#allocation3], %s480
        %s482 = sand.u32 %s187, 1
        %s483 = smul.addr %s482, 4
        %s484 = scalar_lea.vmem [#allocation2], %s483
        %s485 = sand.u32 %s215, 1
        %s486 = scalar_lea.sflag [#allocation5], %s485
        %s487 = sand.u32 %s215, 1
        %s488 = smul.addr %s487, 4
        %s489 = scalar_lea.vmem [#allocation4], %s488
        // Predicated region
        $region45: #{tpu_custom_call.1} parent=43 // pred_check
          %p490 = pneg %p197
        $region46: #{tpu_custom_call.1} parent=43 // pred_check_branch
          %492 = sbr.rel (%p490) target = $region48
        $region47: #{tpu_custom_call.1} parent=43 // pred_region
          %s494 = ssub.s32 64, 64
          %495 = vsyncadd %s481, %s494
          %s496 = sadd.s32 %s30, %s29
          %s497 = smul.addr %s496, 64
          %s498 = scalar_lea.hbm %s6, %s497
          %s500 = sshll.u32 %s484, 4
          %s501 = int_to_ptr.vmem [resolvable:$true] %s500
          %503 = dma.vmem_to_hbm [thread:$0]  %s501, 64, %s498, %s481
        $region48: #{tpu_custom_call.1} parent=43 // pred_fallthru
          _
        // Predicated region
        $region49: #{tpu_custom_call.1} parent=43 // pred_check
          %p504 = pneg %p225
        $region50: #{tpu_custom_call.1} parent=43 // pred_check_branch
          %506 = sbr.rel (%p504) target = $region52
        $region51: #{tpu_custom_call.1} parent=43 // pred_region
          %s508 = ssub.s32 64, 64
          %509 = vsyncadd %s486, %s508
          %s510 = sadd.s32 %s30, %s29
          %s511 = smul.addr %s510, 64
          %s512 = scalar_lea.hbm %s7, %s511
          %s514 = sshll.u32 %s489, 4
          %s515 = int_to_ptr.vmem [resolvable:$true] %s514
          %517 = dma.vmem_to_hbm [thread:$0]  %s515, 64, %s512, %s486
        $region52: #{tpu_custom_call.1} parent=43 // pred_fallthru
          _
      $region44: #{tpu_custom_call.1} parent=5 // pred_fallthru
        _
      %p518 = scmp.le.s32.totalorder 2, %s20
      // Predicated region
      $region53: #{tpu_custom_call.1} parent=5 // pred_check
        %p519 = pneg %p518
      $region54: #{tpu_custom_call.1} parent=5 // pred_check_branch
        %521 = sbr.rel (%p519) target = $region56
      $region55: #{tpu_custom_call.1} parent=5 // pred_region
        %s522 = ssub.s32 %s20, 2
        // Predicated region
        $region57: #{tpu_custom_call.1} parent=55 // pred_check
          %p523 = pneg %p203
        $region58: #{tpu_custom_call.1} parent=55 // pred_check_branch
          %525 = sbr.rel (%p523) target = $region60
        $region59: #{tpu_custom_call.1} parent=55 // pred_region
          %s526 = sand.u32 %s188, 1
          %s527 = scalar_lea.sflag [#allocation3], %s526
          %s528 = sand.u32 %s188, 1
          %s529 = smul.addr %s528, 4
          %s530 = scalar_lea.vmem [#allocation2], %s529
          %531 = dma.done %s527, 64
        $region60: #{tpu_custom_call.1} parent=55 // pred_fallthru
          _
        // Predicated region
        $region61: #{tpu_custom_call.1} parent=55 // pred_check
          %p532 = pneg %p231
        $region62: #{tpu_custom_call.1} parent=55 // pred_check_branch
          %534 = sbr.rel (%p532) target = $region64
        $region63: #{tpu_custom_call.1} parent=55 // pred_region
          %s535 = sand.u32 %s216, 1
          %s536 = scalar_lea.sflag [#allocation5], %s535
          %s537 = sand.u32 %s216, 1
          %s538 = smul.addr %s537, 4
          %s539 = scalar_lea.vmem [#allocation4], %s538
          %540 = dma.done %s536, 64
        $region64: #{tpu_custom_call.1} parent=55 // pred_fallthru
          _
      $region56: #{tpu_custom_call.1} parent=5 // pred_fallthru
        _
    $region6: #{tpu_custom_call.1} parent=1 // loop_footer
      %s24 = sadd.s32 1, %s20
    $region7: #{tpu_custom_call.1} parent=1 // loop_footer_branch
      %19 = sbr.rel target = $region3
    $region8: #{tpu_custom_call.1} parent=1 // loop_exit
      _
    %541 = vsyncpa [#allocation3], 1
    %s542 = scalar_lea.sflag [#allocation3], 1
    %543 = vsyncpa %s542, 1
    %544 = vsyncpa [#allocation5], 1
    %s545 = scalar_lea.sflag [#allocation5], 1
    %546 = vsyncpa %s545, 1

</llo_original>
